<compile_context>
chip_gen: v7x
topology: tpu7x:2x2x1
jax: 0.10.0
libtpu: 0.0.40
codegen_flags: <defaults>
</compile_context>

<pallas_src>
import jax
import jax.numpy as jnp
from jax.experimental import pallas as pl
from jax.experimental.pallas import tpu as pltpu


def _round_up(n, m):
    return ((n + m - 1) // m) * m


def mlp_kernel(x_ref, w1_ref, b1_ref, w2_ref, b2_ref, o_ref):
    # Hidden layer: (TB, 896) bf16 @ (896, 256) bf16 -> f32 acc, + bias, ReLU.
    h = jnp.dot(x_ref[...], w1_ref[...], preferred_element_type=jnp.float32)
    h = jnp.maximum(h + b1_ref[...], 0.0)
    # Output layer: (TB, 256) bf16 @ (256, 128) bf16 -> f32 acc, + bias.
    out = jnp.dot(h.astype(jnp.bfloat16), w2_ref[...],
                  preferred_element_type=jnp.float32)
    o_ref[...] = (out + b2_ref[...]).astype(o_ref.dtype)


def mlp_forward(x_flat, w1, b1, w2, b2, *, tb=None):
    """x_flat: (B, 784) f32; w1: (784, 256); b1: (256,); w2: (256, 10); b2: (10,)."""
    B, D_in = x_flat.shape
    D_h = w1.shape[1]
    D_out = w2.shape[1]

    # Padded dims: K -> multiple of 128, output N -> 128 lanes (unmasked stores).
    D_in_p = _round_up(D_in, 128)      # 784 -> 896
    D_out_p = _round_up(D_out, 128)    # 10  -> 128

    # Batch tile: MXU-friendly 256 rows for large batches, minimal 8-row
    # (sublane-aligned) tile for small demo batches.
    if tb is None:
        tb = 256 if B >= 256 else _round_up(max(B, 8), 8)
    B_p = _round_up(B, tb)

    # Wrapper-side (one-time) padding + bf16 casts. Biases stay f32.
    x_p = jnp.zeros((B_p, D_in_p), jnp.bfloat16)
    x_p = x_p.at[:B, :D_in].set(x_flat.astype(jnp.bfloat16))
    w1_p = jnp.zeros((D_in_p, D_h), jnp.bfloat16)
    w1_p = w1_p.at[:D_in, :].set(w1.astype(jnp.bfloat16))
    w2_p = jnp.zeros((D_h, D_out_p), jnp.bfloat16)
    w2_p = w2_p.at[:, :D_out].set(w2.astype(jnp.bfloat16))
    b1_p = b1.reshape(1, D_h).astype(jnp.float32)
    b2_p = jnp.zeros((1, D_out_p), jnp.float32)
    b2_p = b2_p.at[0, :D_out].set(b2.astype(jnp.float32))

    out_p = pl.pallas_call(
        mlp_kernel,
        out_shape=jax.ShapeDtypeStruct((B_p, D_out_p), jnp.float32),
        grid_spec=pltpu.PrefetchScalarGridSpec(
            num_scalar_prefetch=0,
            grid=(B_p // tb,),
            in_specs=[
                # x: tiled along batch -> double-buffered DMA pipeline.
                pl.BlockSpec((tb, D_in_p), lambda i: (i, 0)),
                # Weights / biases: constant block -> stay VMEM-resident.
                pl.BlockSpec((D_in_p, D_h), lambda i: (0, 0)),
                pl.BlockSpec((1, D_h), lambda i: (0, 0)),
                pl.BlockSpec((D_h, D_out_p), lambda i: (0, 0)),
                pl.BlockSpec((1, D_out_p), lambda i: (0, 0)),
            ],
            out_specs=pl.BlockSpec((tb, D_out_p), lambda i: (i, 0)),
        ),
        compiler_params=pltpu.CompilerParams(
            # Batch blocks are independent -> shardable across v7x's 2 TCs.
            dimension_semantics=("parallel",),
            vmem_limit_bytes=64 << 20,
        ),
    )(x_p, w1_p, b1_p, w2_p, b2_p)

    # Slice padding back off (batch rows and output lanes).
    return out_p[:B, :D_out]


def init_params(key):
    # Deterministic init mimicking PyTorch nn.Linear default:
    # U(-1/sqrt(fan_in), 1/sqrt(fan_in)).
    k1, k2, k3, k4 = jax.random.split(key, 4)
    bound1 = 1.0 / jnp.sqrt(784.0)
    bound2 = 1.0 / jnp.sqrt(256.0)
    w1 = jax.random.uniform(k1, (784, 256), jnp.float32, -bound1, bound1)
    b1 = jax.random.uniform(k2, (256,), jnp.float32, -bound1, bound1)
    w2 = jax.random.uniform(k3, (256, 10), jnp.float32, -bound2, bound2)
    b2 = jax.random.uniform(k4, (10,), jnp.float32, -bound2, bound2)
    return w1, b1, w2, b2


if __name__ == "__main__":
    key = jax.random.PRNGKey(0)
    k_x, k_p = jax.random.split(key)

    B = 8
    # MNIST-style input implied by Linear(784, 256): (B, 1, 28, 28) NCHW.
    x = jax.random.normal(k_x, (B, 1, 28, 28), jnp.float32)
    w1, b1, w2, b2 = init_params(k_p)

    # Flatten (glue, plain JAX) — matches nn.Flatten on NCHW.
    x_flat = x.reshape(B, -1)

    out = mlp_forward(x_flat, w1, b1, w2, b2)
    out = jax.block_until_ready(out)

    # Reference check in plain JAX (f32 path; kernel uses bf16 operands with
    # f32 accumulation, so tolerance is relaxed accordingly).
    ref = jnp.maximum(x_flat @ w1 + b1, 0.0) @ w2 + b2
    assert out.shape == (B, 10)
    assert jnp.allclose(out, ref, atol=3e-2, rtol=3e-2), (
        float(jnp.max(jnp.abs(out - ref))))

    print("KERNEL_OK")
</pallas_src>

<mosaic_0001>
module attributes {stable_mosaic.version = 11 : i64} {
  func.func @mlp_kernel(%arg0: i32, %arg1: memref<8x896xbf16, #tpu.memory_space<vmem>>, %arg2: memref<896x256xbf16, #tpu.memory_space<vmem>>, %arg3: memref<1x256xf32, #tpu.memory_space<vmem>>, %arg4: memref<256x128xbf16, #tpu.memory_space<vmem>>, %arg5: memref<1x128xf32, #tpu.memory_space<vmem>>, %arg6: memref<8x128xf32, #tpu.memory_space<vmem>>) attributes {dimension_semantics = [#tpu.dimension_semantics<parallel>], iteration_bounds = array<i64: 1>, scalar_prefetch = 0 : i64, scratch_operands = 0 : i64, tpu.core_type = #tpu.core_type<tc>, window_params = [{transform_indices = @transform_0, window_bounds = array<i64: 8, 896>}, {pipeline_mode = #tpu.pipeline_mode<synchronous>, transform_indices = @transform_1, window_bounds = array<i64: 896, 256>}, {pipeline_mode = #tpu.pipeline_mode<synchronous>, transform_indices = @transform_2, window_bounds = array<i64: 1, 256>}, {pipeline_mode = #tpu.pipeline_mode<synchronous>, transform_indices = @transform_3, window_bounds = array<i64: 256, 128>}, {pipeline_mode = #tpu.pipeline_mode<synchronous>, transform_indices = @transform_4, window_bounds = array<i64: 1, 128>}, {transform_indices = @transform_5, window_bounds = array<i64: 8, 128>}]} {
    %c0 = arith.constant 0 : index
    %c0_0 = arith.constant 0 : index
    %0 = vector.load %arg1[%c0, %c0_0] : memref<8x896xbf16, #tpu.memory_space<vmem>>, vector<8x896xbf16>
    %c0_1 = arith.constant 0 : index
    %c0_2 = arith.constant 0 : index
    %1 = vector.load %arg2[%c0_1, %c0_2] : memref<896x256xbf16, #tpu.memory_space<vmem>>, vector<896x256xbf16>
    %cst = arith.constant dense<0.000000e+00> : vector<8x256xf32>
    %2 = tpu.matmul %0, %1, %cst {dimension_numbers = #tpu.dot_dimension_numbers<[1], [0], [0], [1], [0, 0, 1, 1], [], []>} : vector<8x896xbf16>, vector<896x256xbf16>, vector<8x256xf32> -> vector<8x256xf32>
    %c0_3 = arith.constant 0 : index
    %c0_4 = arith.constant 0 : index
    %3 = vector.load %arg3[%c0_3, %c0_4] : memref<1x256xf32, #tpu.memory_space<vmem>>, vector<1x256xf32>
    %4 = vector.broadcast %3 : vector<1x256xf32> to vector<8x256xf32>
    %5 = arith.addf %2, %4 : vector<8x256xf32>
    %cst_5 = arith.constant 0.000000e+00 : f32
    %6 = vector.broadcast %cst_5 : f32 to vector<8x256xf32>
    %7 = arith.maximumf %5, %6 : vector<8x256xf32>
    %8 = arith.truncf %7 : vector<8x256xf32> to vector<8x256xbf16>
    %c0_6 = arith.constant 0 : index
    %c0_7 = arith.constant 0 : index
    %9 = vector.load %arg4[%c0_6, %c0_7] : memref<256x128xbf16, #tpu.memory_space<vmem>>, vector<256x128xbf16>
    %cst_8 = arith.constant dense<0.000000e+00> : vector<8x128xf32>
    %10 = tpu.matmul %8, %9, %cst_8 {dimension_numbers = #tpu.dot_dimension_numbers<[1], [0], [0], [1], [0, 0, 1, 1], [], []>} : vector<8x256xbf16>, vector<256x128xbf16>, vector<8x128xf32> -> vector<8x128xf32>
    %c0_9 = arith.constant 0 : index
    %c0_10 = arith.constant 0 : index
    %11 = vector.load %arg5[%c0_9, %c0_10] : memref<1x128xf32, #tpu.memory_space<vmem>>, vector<1x128xf32>
    %12 = vector.broadcast %11 : vector<1x128xf32> to vector<8x128xf32>
    %13 = arith.addf %10, %12 : vector<8x128xf32>
    %c0_11 = arith.constant 0 : index
    %c0_12 = arith.constant 0 : index
    %14 = vector.load %arg6[%c0_11, %c0_12] : memref<8x128xf32, #tpu.memory_space<vmem>>, vector<8x128xf32>
    tpu.vector_store %arg6[%c0_11, %c0_12], %13 {strides = array<i32>} : memref<8x128xf32, #tpu.memory_space<vmem>>, vector<8x128xf32>,
    return
  }
  func.func @transform_0(%arg0: i32) -> (i32, i32) {
    %c0_i32 = arith.constant 0 : i32
    %c0_i32_0 = arith.constant 0 : i32
    return %arg0, %c0_i32 : i32, i32
  }
  func.func @transform_1(%arg0: i32) -> (i32, i32) {
    %c0_i32 = arith.constant 0 : i32
    %c0_i32_0 = arith.constant 0 : i32
    %c0_i32_1 = arith.constant 0 : i32
    return %c0_i32, %c0_i32_0 : i32, i32
  }
  func.func @transform_2(%arg0: i32) -> (i32, i32) {
    %c0_i32 = arith.constant 0 : i32
    %c0_i32_0 = arith.constant 0 : i32
    %c0_i32_1 = arith.constant 0 : i32
    return %c0_i32, %c0_i32_0 : i32, i32
  }
  func.func @transform_3(%arg0: i32) -> (i32, i32) {
    %c0_i32 = arith.constant 0 : i32
    %c0_i32_0 = arith.constant 0 : i32
    %c0_i32_1 = arith.constant 0 : i32
    return %c0_i32, %c0_i32_0 : i32, i32
  }
  func.func @transform_4(%arg0: i32) -> (i32, i32) {
    %c0_i32 = arith.constant 0 : i32
    %c0_i32_0 = arith.constant 0 : i32
    %c0_i32_1 = arith.constant 0 : i32
    return %c0_i32, %c0_i32_0 : i32, i32
  }
  func.func @transform_5(%arg0: i32) -> (i32, i32) {
    %c0_i32 = arith.constant 0 : i32
    %c0_i32_0 = arith.constant 0 : i32
    return %arg0, %c0_i32 : i32, i32
  }
}

</mosaic_0001>

<llo_original>
// kernel: tpu_custom_call.1
$region0: #{tpu_custom_call.1}
  #allocation0 [shape = 'u32[]', space=smem, size = 0x4, offset = 0x4, fixed_abs, tag = 'smem constant byte address 0x4 - core index']
  #allocation1 [shape = 'u32[144,128]{1,0:T(1,128)}', space=vmem, size = 0x12000, scoped, tag = 'internal scratch']
  %s0 = inlined_call_operand.hbm [shape: bf16[8,896], index: 0, kind: input, shape index: {}]
  %s1 = inlined_call_operand.hbm [shape: bf16[896,256], index: 1, kind: input, shape index: {}]
  %s2 = inlined_call_operand.hbm [shape: f32[1,256], index: 2, kind: input, shape index: {}]
  %s3 = inlined_call_operand.hbm [shape: bf16[256,128], index: 3, kind: input, shape index: {}]
  %s4 = inlined_call_operand.hbm [shape: f32[1,128], index: 4, kind: input, shape index: {}]
  %s5 = inlined_call_operand.hbm [shape: f32[8,128], index: 5, kind: output, shape index: {}]
  %s6 = sld [smem:[#allocation0]]
  $region50: #{tpu_custom_call.1} parent=0
    _
  %s8 = ssub.s32 1, %s6
  %s9 = scalar_select 0, %s8, %s6
  $region1: #{tpu_custom_call.1} parent=0
    #allocation2 [shape = 'u8[14336]{0}', space=vmem, size = 0x3800, scoped, tag = 'input window, operand 0, single buffered']
    #allocation3 [shape = 's32[1]{0}', space=sflag, size = 0x4, scoped, tag = 'scoped memory for tpu_custom_call.1']
    #allocation4 [shape = 's32[1]{0}', space=sflag, size = 0x4, scoped, tag = 'scoped memory for tpu_custom_call.1']
    #allocation5 [shape = 'u8[458752]{0}', space=vmem, size = 0x70000, scoped, tag = 'input window, operand 1, single buffered']
    #allocation6 [shape = 's32[1]{0}', space=sflag, size = 0x4, scoped, tag = 'scoped memory for tpu_custom_call.1']
    #allocation7 [shape = 'u8[1024]{0}', space=vmem, size = 0x400, scoped, tag = 'input window, operand 2, single buffered']
    #allocation8 [shape = 'u8[65536]{0}', space=vmem, size = 0x10000, scoped, tag = 'input window, operand 3, single buffered']
    #allocation9 [shape = 's32[1]{0}', space=sflag, size = 0x4, scoped, tag = 'scoped memory for tpu_custom_call.1']
    #allocation10 [shape = 'u8[512]{0}', space=vmem, size = 0x400, scoped, tag = 'input window, operand 4, single buffered']
    #allocation11 [shape = 'u8[4096]{0}', space=vmem, size = 0x1000, scoped, tag = 'output window, operand 0, single buffered']
    %10 = vsyncpa [#allocation3], 0
    %11 = vsyncpa [#allocation6], 0
    %12 = vsyncpa [#allocation9], 0
    %13 = vsyncpa [#allocation4], 0
    // Predicated region
    $region2: #{tpu_custom_call.1} parent=1 // pred_check
      _
    $region3: #{tpu_custom_call.1} parent=1 // pred_check_branch
      %15 = sbr.rel (0) target = $region5
    $region4: #{tpu_custom_call.1} parent=1 // pred_region
      %s17 = ssub.s32 448, 448
      %18 = vsyncadd [#allocation3], %s17
      %s20 = sshll.u32 [#allocation2], 4
      %s21 = int_to_ptr.vmem [resolvable:$true] %s20
      %23 = dma.hbm_to_vmem [thread:$0]  %s0, 448, %s21, [#allocation3]
    $region5: #{tpu_custom_call.1} parent=1 // pred_fallthru
      _
    // Predicated region
    $region6: #{tpu_custom_call.1} parent=1 // pred_check
      _
    $region7: #{tpu_custom_call.1} parent=1 // pred_check_branch
      %25 = sbr.rel (0) target = $region9
    $region8: #{tpu_custom_call.1} parent=1 // pred_region
      %s27 = ssub.s32 14336, 14336
      %28 = vsyncadd [#allocation6], %s27
      %s29 = sshll.u32 [#allocation5], 4
      %s30 = int_to_ptr.vmem [resolvable:$true] %s29
      %35 = dma.hbm_to_vmem [thread:$0]  %s1, 14336, %s30, [#allocation6], 128, 128, 8
    $region9: #{tpu_custom_call.1} parent=1 // pred_fallthru
      _
    // Predicated region
    $region10: #{tpu_custom_call.1} parent=1 // pred_check
      _
    $region11: #{tpu_custom_call.1} parent=1 // pred_check_branch
      %37 = sbr.rel (0) target = $region13
    $region12: #{tpu_custom_call.1} parent=1 // pred_region
      %s39 = ssub.s32 32, 32
      %40 = vsyncadd [#allocation6], %s39
      %s42 = sshll.u32 [#allocation7], 4
      %s43 = int_to_ptr.vmem [resolvable:$true] %s42
      %45 = dma.hbm_to_vmem [thread:$0]  %s2, 32, %s43, [#allocation6]
    $region13: #{tpu_custom_call.1} parent=1 // pred_fallthru
      _
    // Predicated region
    $region14: #{tpu_custom_call.1} parent=1 // pred_check
      _
    $region15: #{tpu_custom_call.1} parent=1 // pred_check_branch
      %47 = sbr.rel (0) target = $region17
    $region16: #{tpu_custom_call.1} parent=1 // pred_region
      %s49 = ssub.s32 2048, 2048
      %50 = vsyncadd [#allocation9], %s49
      %s51 = sshll.u32 [#allocation8], 4
      %s52 = int_to_ptr.vmem [resolvable:$true] %s51
      %57 = dma.hbm_to_vmem [thread:$0]  %s3, 2048, %s52, [#allocation9], 64, 64, 4
    $region17: #{tpu_custom_call.1} parent=1 // pred_fallthru
      _
    // Predicated region
    $region18: #{tpu_custom_call.1} parent=1 // pred_check
      _
    $region19: #{tpu_custom_call.1} parent=1 // pred_check_branch
      %59 = sbr.rel (0) target = $region21
    $region20: #{tpu_custom_call.1} parent=1 // pred_region
      %s61 = ssub.s32 16, 16
      %62 = vsyncadd [#allocation9], %s61
      %s64 = sshll.u32 [#allocation10], 4
      %s65 = int_to_ptr.vmem [resolvable:$true] %s64
      %67 = dma.hbm_to_vmem [thread:$0]  %s4, 16, %s65, [#allocation9]
    $region21: #{tpu_custom_call.1} parent=1 // pred_fallthru
      _
    // Predicated region
    $region22: #{tpu_custom_call.1} parent=1 // pred_check
      _
    $region23: #{tpu_custom_call.1} parent=1 // pred_check_branch
      %69 = sbr.rel (0) target = $region25
    $region24: #{tpu_custom_call.1} parent=1 // pred_region
      %70 = dma.done [#allocation3], 448
    $region25: #{tpu_custom_call.1} parent=1 // pred_fallthru
      _
    // Predicated region
    $region26: #{tpu_custom_call.1} parent=1 // pred_check
      _
    $region27: #{tpu_custom_call.1} parent=1 // pred_check_branch
      %72 = sbr.rel (0) target = $region29
    $region28: #{tpu_custom_call.1} parent=1 // pred_region
      %73 = dma.done [#allocation6], 14336
    $region29: #{tpu_custom_call.1} parent=1 // pred_fallthru
      _
    // Predicated region
    $region30: #{tpu_custom_call.1} parent=1 // pred_check
      _
    $region31: #{tpu_custom_call.1} parent=1 // pred_check_branch
      %75 = sbr.rel (0) target = $region33
    $region32: #{tpu_custom_call.1} parent=1 // pred_region
      %76 = dma.done [#allocation6], 32
    $region33: #{tpu_custom_call.1} parent=1 // pred_fallthru
      _
    // Predicated region
    $region34: #{tpu_custom_call.1} parent=1 // pred_check
      _
    $region35: #{tpu_custom_call.1} parent=1 // pred_check_branch
      %78 = sbr.rel (0) target = $region37
    $region36: #{tpu_custom_call.1} parent=1 // pred_region
      %79 = dma.done [#allocation9], 2048
    $region37: #{tpu_custom_call.1} parent=1 // pred_fallthru
      _
    // Predicated region
    $region38: #{tpu_custom_call.1} parent=1 // pred_check
      _
    $region39: #{tpu_custom_call.1} parent=1 // pred_check_branch
      %81 = sbr.rel (0) target = $region41
    $region40: #{tpu_custom_call.1} parent=1 // pred_region
      %82 = dma.done [#allocation9], 16
    $region41: #{tpu_custom_call.1} parent=1 // pred_fallthru
      _
    %v84 = vld [vmem:[#allocation2] sm:$0xff]
    %v85 = vld [vmem:[#allocation2 + $0x8] sm:$0xff]
    %v86 = vld [vmem:[#allocation2 + $0x10] sm:$0xff]
    %v87 = vld [vmem:[#allocation2 + $0x18] sm:$0xf]
    %v88 = vld [vmem:[#allocation5] sm:$0xff]
    %v89 = vld [vmem:[#allocation5 + $0x8] sm:$0xff]
    %v90 = vld [vmem:[#allocation5 + $0x10] sm:$0xff]
    %v91 = vld [vmem:[#allocation5 + $0x18] sm:$0xff]
    %v92 = vld [vmem:[#allocation5 + $0x20] sm:$0xff]
    %v93 = vld [vmem:[#allocation5 + $0x28] sm:$0xff]
    %v94 = vld [vmem:[#allocation5 + $0x30] sm:$0xff]
    %v95 = vld [vmem:[#allocation5 + $0x38] sm:$0xff]
    %v96 = vld [vmem:[#allocation5 + $0x40] sm:$0xff]
    %v97 = vld [vmem:[#allocation5 + $0x48] sm:$0xff]
    %v98 = vld [vmem:[#allocation5 + $0x50] sm:$0xff]
    %v99 = vld [vmem:[#allocation5 + $0x58] sm:$0xff]
    %v100 = vld [vmem:[#allocation5 + $0x60] sm:$0xff]
    %v101 = vld [vmem:[#allocation5 + $0x68] sm:$0xff]
    %v102 = vld [vmem:[#allocation5 + $0x70] sm:$0xff]
    %v103 = vld [vmem:[#allocation5 + $0x78] sm:$0xff]
    %v104 = vld [vmem:[#allocation5 + $0x80] sm:$0xff]
    %v105 = vld [vmem:[#allocation5 + $0x88] sm:$0xff]
    %v106 = vld [vmem:[#allocation5 + $0x90] sm:$0xff]
    %v107 = vld [vmem:[#allocation5 + $0x98] sm:$0xff]
    %v108 = vld [vmem:[#allocation5 + $0xa0] sm:$0xff]
    %v109 = vld [vmem:[#allocation5 + $0xa8] sm:$0xff]
    %v110 = vld [vmem:[#allocation5 + $0xb0] sm:$0xff]
    %v111 = vld [vmem:[#allocation5 + $0xb8] sm:$0xff]
    %v112 = vld [vmem:[#allocation5 + $0xc0] sm:$0xff]
    %v113 = vld [vmem:[#allocation5 + $0xc8] sm:$0xff]
    %v114 = vld [vmem:[#allocation5 + $0xd0] sm:$0xff]
    %v115 = vld [vmem:[#allocation5 + $0xd8] sm:$0xff]
    %v116 = vld [vmem:[#allocation5 + $0xe0] sm:$0xff]
    %v117 = vld [vmem:[#allocation5 + $0xe8] sm:$0xff]
    %v118 = vld [vmem:[#allocation5 + $0xf0] sm:$0xff]
    %v119 = vld [vmem:[#allocation5 + $0xf8] sm:$0xff]
    %v120 = vld [vmem:[#allocation5 + $0x100] sm:$0xff]
    %v121 = vld [vmem:[#allocation5 + $0x108] sm:$0xff]
    %v122 = vld [vmem:[#allocation5 + $0x110] sm:$0xff]
    %v123 = vld [vmem:[#allocation5 + $0x118] sm:$0xff]
    %v124 = vld [vmem:[#allocation5 + $0x120] sm:$0xff]
    %v125 = vld [vmem:[#allocation5 + $0x128] sm:$0xff]
    %v126 = vld [vmem:[#allocation5 + $0x130] sm:$0xff]
    %v127 = vld [vmem:[#allocation5 + $0x138] sm:$0xff]
    %v128 = vld [vmem:[#allocation5 + $0x140] sm:$0xff]
    %v129 = vld [vmem:[#allocation5 + $0x148] sm:$0xff]
    %v130 = vld [vmem:[#allocation5 + $0x150] sm:$0xff]
    %v131 = vld [vmem:[#allocation5 + $0x158] sm:$0xff]
    %v132 = vld [vmem:[#allocation5 + $0x160] sm:$0xff]
    %v133 = vld [vmem:[#allocation5 + $0x168] sm:$0xff]
    %v134 = vld [vmem:[#allocation5 + $0x170] sm:$0xff]
    %v135 = vld [vmem:[#allocation5 + $0x178] sm:$0xff]
    %v136 = vld [vmem:[#allocation5 + $0x180] sm:$0xff]
    %v137 = vld [vmem:[#allocation5 + $0x188] sm:$0xff]
    %v138 = vld [vmem:[#allocation5 + $0x190] sm:$0xff]
    %v139 = vld [vmem:[#allocation5 + $0x198] sm:$0xff]
    %v140 = vld [vmem:[#allocation5 + $0x1a0] sm:$0xff]
    %v141 = vld [vmem:[#allocation5 + $0x1a8] sm:$0xff]
    %v142 = vld [vmem:[#allocation5 + $0x1b0] sm:$0xff]
    %v143 = vld [vmem:[#allocation5 + $0x1b8] sm:$0xff]
    %v144 = vld [vmem:[#allocation5 + $0x1c0] sm:$0xff]
    %v145 = vld [vmem:[#allocation5 + $0x1c8] sm:$0xff]
    %v146 = vld [vmem:[#allocation5 + $0x1d0] sm:$0xff]
    %v147 = vld [vmem:[#allocation5 + $0x1d8] sm:$0xff]
    %v148 = vld [vmem:[#allocation5 + $0x1e0] sm:$0xff]
    %v149 = vld [vmem:[#allocation5 + $0x1e8] sm:$0xff]
    %v150 = vld [vmem:[#allocation5 + $0x1f0] sm:$0xff]
    %v151 = vld [vmem:[#allocation5 + $0x1f8] sm:$0xff]
    %v152 = vld [vmem:[#allocation5 + $0x200] sm:$0xff]
    %v153 = vld [vmem:[#allocation5 + $0x208] sm:$0xff]
    %v154 = vld [vmem:[#allocation5 + $0x210] sm:$0xff]
    %v155 = vld [vmem:[#allocation5 + $0x218] sm:$0xff]
    %v156 = vld [vmem:[#allocation5 + $0x220] sm:$0xff]
    %v157 = vld [vmem:[#allocation5 + $0x228] sm:$0xff]
    %v158 = vld [vmem:[#allocation5 + $0x230] sm:$0xff]
    %v159 = vld [vmem:[#allocation5 + $0x238] sm:$0xff]
    %v160 = vld [vmem:[#allocation5 + $0x240] sm:$0xff]
    %v161 = vld [vmem:[#allocation5 + $0x248] sm:$0xff]
    %v162 = vld [vmem:[#allocation5 + $0x250] sm:$0xff]
    %v163 = vld [vmem:[#allocation5 + $0x258] sm:$0xff]
    %v164 = vld [vmem:[#allocation5 + $0x260] sm:$0xff]
    %v165 = vld [vmem:[#allocation5 + $0x268] sm:$0xff]
    %v166 = vld [vmem:[#allocation5 + $0x270] sm:$0xff]
    %v167 = vld [vmem:[#allocation5 + $0x278] sm:$0xff]
    %v168 = vld [vmem:[#allocation5 + $0x280] sm:$0xff]
    %v169 = vld [vmem:[#allocation5 + $0x288] sm:$0xff]
    %v170 = vld [vmem:[#allocation5 + $0x290] sm:$0xff]
    %v171 = vld [vmem:[#allocation5 + $0x298] sm:$0xff]
    %v172 = vld [vmem:[#allocation5 + $0x2a0] sm:$0xff]
    %v173 = vld [vmem:[#allocation5 + $0x2a8] sm:$0xff]
    %v174 = vld [vmem:[#allocation5 + $0x2b0] sm:$0xff]
    %v175 = vld [vmem:[#allocation5 + $0x2b8] sm:$0xff]
    %v176 = vld [vmem:[#allocation5 + $0x2c0] sm:$0xff]
    %v177 = vld [vmem:[#allocation5 + $0x2c8] sm:$0xff]
    %v178 = vld [vmem:[#allocation5 + $0x2d0] sm:$0xff]
    %v179 = vld [vmem:[#allocation5 + $0x2d8] sm:$0xff]
    %v180 = vld [vmem:[#allocation5 + $0x2e0] sm:$0xff]
    %v181 = vld [vmem:[#allocation5 + $0x2e8] sm:$0xff]
    %v182 = vld [vmem:[#allocation5 + $0x2f0] sm:$0xff]
    %v183 = vld [vmem:[#allocation5 + $0x2f8] sm:$0xff]
    %v184 = vld [vmem:[#allocation5 + $0x300] sm:$0xff]
    %v185 = vld [vmem:[#allocation5 + $0x308] sm:$0xff]
    %v186 = vld [vmem:[#allocation5 + $0x310] sm:$0xff]
    %v187 = vld [vmem:[#allocation5 + $0x318] sm:$0xff]
    %v188 = vld [vmem:[#allocation5 + $0x320] sm:$0xff]
    %v189 = vld [vmem:[#allocation5 + $0x328] sm:$0xff]
    %v190 = vld [vmem:[#allocation5 + $0x330] sm:$0xff]
    %v191 = vld [vmem:[#allocation5 + $0x338] sm:$0xff]
    %v192 = vld [vmem:[#allocation5 + $0x340] sm:$0xff]
    %v193 = vld [vmem:[#allocation5 + $0x348] sm:$0xff]
    %v194 = vld [vmem:[#allocation5 + $0x350] sm:$0xff]
    %v195 = vld [vmem:[#allocation5 + $0x358] sm:$0xff]
    %v196 = vld [vmem:[#allocation5 + $0x360] sm:$0xff]
    %v197 = vld [vmem:[#allocation5 + $0x368] sm:$0xff]
    %v198 = vld [vmem:[#allocation5 + $0x370] sm:$0xff]
    %v199 = vld [vmem:[#allocation5 + $0x378] sm:$0xff]
    %v200 = vld [vmem:[#allocation7] sm:$0x3]
    %v202 = vlaneseq
    %v203 = vshrl.u32 %v202, 7
    %v204 = vsub.s32 0, %v203
    %v205 = vrot.slane %v200, %v204
    %v206 = vlaneseq
    %v207 = vshrl.u32 %v206, 7
    %v208 = vsub.s32 1, %v207
    %v209 = vrot.slane %v200, %v208
    %v216 = vunpack.c.l.b16 %v84
    %v217 = vunpack.c.h.b16 %v84
    %v218 = vunpack.c.l.b16 %v85
    %v219 = vunpack.c.h.b16 %v85
    %v220 = vunpack.c.l.b16 %v86
    %v221 = vunpack.c.h.b16 %v86
    %v222 = vunpack.c.l.b16 %v87
    %v223 = vpack.c.b16 %v216, %v216
    %v224 = vpack.c.b16 %v217, %v217
    %v225 = vpack.c.b16 %v218, %v218
    %v226 = vpack.c.b16 %v219, %v219
    %v227 = vpack.c.b16 %v220, %v220
    %v228 = vpack.c.b16 %v221, %v221
    %v229 = vpack.c.b16 %v222, %v222
    %v349 = vunpack.c.l.b16 %v88
    %v350 = vunpack.c.h.b16 %v88
    %v351 = vunpack.c.l.b16 %v89
    %v352 = vunpack.c.h.b16 %v89
    %v353 = vunpack.c.l.b16 %v90
    %v354 = vunpack.c.h.b16 %v90
    %v355 = vunpack.c.l.b16 %v91
    %v356 = vunpack.c.h.b16 %v91
    %v357 = vunpack.c.l.b16 %v92
    %v358 = vunpack.c.h.b16 %v92
    %v359 = vunpack.c.l.b16 %v93
    %v360 = vunpack.c.h.b16 %v93
    %v361 = vunpack.c.l.b16 %v94
    %v362 = vunpack.c.h.b16 %v94
    %v363 = vunpack.c.l.b16 %v95
    %v364 = vunpack.c.h.b16 %v95
    %v365 = vunpack.c.l.b16 %v96
    %v366 = vunpack.c.h.b16 %v96
    %v367 = vunpack.c.l.b16 %v97
    %v368 = vunpack.c.h.b16 %v97
    %v369 = vunpack.c.l.b16 %v98
    %v370 = vunpack.c.h.b16 %v98
    %v371 = vunpack.c.l.b16 %v99
    %v372 = vunpack.c.h.b16 %v99
    %v373 = vunpack.c.l.b16 %v100
    %v374 = vunpack.c.h.b16 %v100
    %v375 = vunpack.c.l.b16 %v101
    %v376 = vunpack.c.h.b16 %v101
    %v377 = vunpack.c.l.b16 %v102
    %v378 = vunpack.c.h.b16 %v102
    %v379 = vunpack.c.l.b16 %v103
    %v380 = vunpack.c.h.b16 %v103
    %v381 = vunpack.c.l.b16 %v104
    %v382 = vunpack.c.h.b16 %v104
    %v383 = vunpack.c.l.b16 %v105
    %v384 = vunpack.c.h.b16 %v105
    %v385 = vunpack.c.l.b16 %v106
    %v386 = vunpack.c.h.b16 %v106
    %v387 = vunpack.c.l.b16 %v107
    %v388 = vunpack.c.h.b16 %v107
    %v389 = vunpack.c.l.b16 %v108
    %v390 = vunpack.c.h.b16 %v108
    %v391 = vunpack.c.l.b16 %v109
    %v392 = vunpack.c.h.b16 %v109
    %v393 = vunpack.c.l.b16 %v110
    %v394 = vunpack.c.h.b16 %v110
    %v395 = vunpack.c.l.b16 %v111
    %v396 = vunpack.c.h.b16 %v111
    %v397 = vunpack.c.l.b16 %v112
    %v398 = vunpack.c.h.b16 %v112
    %v399 = vunpack.c.l.b16 %v113
    %v400 = vunpack.c.h.b16 %v113
    %v401 = vunpack.c.l.b16 %v114
    %v402 = vunpack.c.h.b16 %v114
    %v403 = vunpack.c.l.b16 %v115
    %v404 = vunpack.c.h.b16 %v115
    %v405 = vunpack.c.l.b16 %v116
    %v406 = vunpack.c.h.b16 %v116
    %v407 = vunpack.c.l.b16 %v117
    %v408 = vunpack.c.h.b16 %v117
    %v409 = vunpack.c.l.b16 %v118
    %v410 = vunpack.c.h.b16 %v118
    %v411 = vunpack.c.l.b16 %v119
    %v412 = vunpack.c.h.b16 %v119
    %v413 = vunpack.c.l.b16 %v120
    %v414 = vunpack.c.h.b16 %v120
    %v415 = vunpack.c.l.b16 %v121
    %v416 = vunpack.c.h.b16 %v121
    %v417 = vunpack.c.l.b16 %v122
    %v418 = vunpack.c.h.b16 %v122
    %v419 = vunpack.c.l.b16 %v123
    %v420 = vunpack.c.h.b16 %v123
    %v421 = vunpack.c.l.b16 %v124
    %v422 = vunpack.c.h.b16 %v124
    %v423 = vunpack.c.l.b16 %v125
    %v424 = vunpack.c.h.b16 %v125
    %v425 = vunpack.c.l.b16 %v126
    %v426 = vunpack.c.h.b16 %v126
    %v427 = vunpack.c.l.b16 %v127
    %v428 = vunpack.c.h.b16 %v127
    %v429 = vunpack.c.l.b16 %v128
    %v430 = vunpack.c.h.b16 %v128
    %v431 = vunpack.c.l.b16 %v129
    %v432 = vunpack.c.h.b16 %v129
    %v433 = vunpack.c.l.b16 %v130
    %v434 = vunpack.c.h.b16 %v130
    %v435 = vunpack.c.l.b16 %v131
    %v436 = vunpack.c.h.b16 %v131
    %v437 = vunpack.c.l.b16 %v132
    %v438 = vunpack.c.h.b16 %v132
    %v439 = vunpack.c.l.b16 %v133
    %v440 = vunpack.c.h.b16 %v133
    %v441 = vunpack.c.l.b16 %v134
    %v442 = vunpack.c.h.b16 %v134
    %v443 = vunpack.c.l.b16 %v135
    %v444 = vunpack.c.h.b16 %v135
    %v445 = vunpack.c.l.b16 %v136
    %v446 = vunpack.c.h.b16 %v136
    %v447 = vunpack.c.l.b16 %v137
    %v448 = vunpack.c.h.b16 %v137
    %v449 = vunpack.c.l.b16 %v138
    %v450 = vunpack.c.h.b16 %v138
    %v451 = vunpack.c.l.b16 %v139
    %v452 = vunpack.c.h.b16 %v139
    %v453 = vunpack.c.l.b16 %v140
    %v454 = vunpack.c.h.b16 %v140
    %v455 = vunpack.c.l.b16 %v141
    %v456 = vunpack.c.h.b16 %v141
    %v457 = vunpack.c.l.b16 %v142
    %v458 = vunpack.c.h.b16 %v142
    %v459 = vunpack.c.l.b16 %v143
    %v460 = vunpack.c.h.b16 %v143
    %v461 = vunpack.c.l.b16 %v144
    %v462 = vunpack.c.h.b16 %v144
    %v463 = vunpack.c.l.b16 %v145
    %v464 = vunpack.c.h.b16 %v145
    %v465 = vunpack.c.l.b16 %v146
    %v466 = vunpack.c.h.b16 %v146
    %v467 = vunpack.c.l.b16 %v147
    %v468 = vunpack.c.h.b16 %v147
    %v469 = vunpack.c.l.b16 %v148
    %v470 = vunpack.c.h.b16 %v148
    %v471 = vunpack.c.l.b16 %v149
    %v472 = vunpack.c.h.b16 %v149
    %v473 = vunpack.c.l.b16 %v150
    %v474 = vunpack.c.h.b16 %v150
    %v475 = vunpack.c.l.b16 %v151
    %v476 = vunpack.c.h.b16 %v151
    %v477 = vunpack.c.l.b16 %v152
    %v478 = vunpack.c.h.b16 %v152
    %v479 = vunpack.c.l.b16 %v153
    %v480 = vunpack.c.h.b16 %v153
    %v481 = vunpack.c.l.b16 %v154
    %v482 = vunpack.c.h.b16 %v154
    %v483 = vunpack.c.l.b16 %v155
    %v484 = vunpack.c.h.b16 %v155
    %v485 = vunpack.c.l.b16 %v156
    %v486 = vunpack.c.h.b16 %v156
    %v487 = vunpack.c.l.b16 %v157
    %v488 = vunpack.c.h.b16 %v157
    %v489 = vunpack.c.l.b16 %v158
    %v490 = vunpack.c.h.b16 %v158
    %v491 = vunpack.c.l.b16 %v159
    %v492 = vunpack.c.h.b16 %v159
    %v493 = vunpack.c.l.b16 %v160
    %v494 = vunpack.c.h.b16 %v160
    %v495 = vunpack.c.l.b16 %v161
    %v496 = vunpack.c.h.b16 %v161
    %v497 = vunpack.c.l.b16 %v162
    %v498 = vunpack.c.h.b16 %v162
    %v499 = vunpack.c.l.b16 %v163
    %v500 = vunpack.c.h.b16 %v163
    %v501 = vunpack.c.l.b16 %v164
    %v502 = vunpack.c.h.b16 %v164
    %v503 = vunpack.c.l.b16 %v165
    %v504 = vunpack.c.h.b16 %v165
    %v505 = vunpack.c.l.b16 %v166
    %v506 = vunpack.c.h.b16 %v166
    %v507 = vunpack.c.l.b16 %v167
    %v508 = vunpack.c.h.b16 %v167
    %v509 = vunpack.c.l.b16 %v168
    %v510 = vunpack.c.h.b16 %v168
    %v511 = vunpack.c.l.b16 %v169
    %v512 = vunpack.c.h.b16 %v169
    %v513 = vunpack.c.l.b16 %v170
    %v514 = vunpack.c.h.b16 %v170
    %v515 = vunpack.c.l.b16 %v171
    %v516 = vunpack.c.h.b16 %v171
    %v517 = vunpack.c.l.b16 %v172
    %v518 = vunpack.c.h.b16 %v172
    %v519 = vunpack.c.l.b16 %v173
    %v520 = vunpack.c.h.b16 %v173
    %v521 = vunpack.c.l.b16 %v174
    %v522 = vunpack.c.h.b16 %v174
    %v523 = vunpack.c.l.b16 %v175
    %v524 = vunpack.c.h.b16 %v175
    %v525 = vunpack.c.l.b16 %v176
    %v526 = vunpack.c.h.b16 %v176
    %v527 = vunpack.c.l.b16 %v177
    %v528 = vunpack.c.h.b16 %v177
    %v529 = vunpack.c.l.b16 %v178
    %v530 = vunpack.c.h.b16 %v178
    %v531 = vunpack.c.l.b16 %v179
    %v532 = vunpack.c.h.b16 %v179
    %v533 = vunpack.c.l.b16 %v180
    %v534 = vunpack.c.h.b16 %v180
    %v535 = vunpack.c.l.b16 %v181
    %v536 = vunpack.c.h.b16 %v181
    %v537 = vunpack.c.l.b16 %v182
    %v538 = vunpack.c.h.b16 %v182
    %v539 = vunpack.c.l.b16 %v183
    %v540 = vunpack.c.h.b16 %v183
    %v541 = vunpack.c.l.b16 %v184
    %v542 = vunpack.c.h.b16 %v184
    %v543 = vunpack.c.l.b16 %v185
    %v544 = vunpack.c.h.b16 %v185
    %v545 = vunpack.c.l.b16 %v186
    %v546 = vunpack.c.h.b16 %v186
    %v547 = vunpack.c.l.b16 %v187
    %v548 = vunpack.c.h.b16 %v187
    %v549 = vunpack.c.l.b16 %v188
    %v550 = vunpack.c.h.b16 %v188
    %v551 = vunpack.c.l.b16 %v189
    %v552 = vunpack.c.h.b16 %v189
    %v553 = vunpack.c.l.b16 %v190
    %v554 = vunpack.c.h.b16 %v190
    %v555 = vunpack.c.l.b16 %v191
    %v556 = vunpack.c.h.b16 %v191
    %v557 = vunpack.c.l.b16 %v192
    %v558 = vunpack.c.h.b16 %v192
    %v559 = vunpack.c.l.b16 %v193
    %v560 = vunpack.c.h.b16 %v193
    %v561 = vunpack.c.l.b16 %v194
    %v562 = vunpack.c.h.b16 %v194
    %v563 = vunpack.c.l.b16 %v195
    %v564 = vunpack.c.h.b16 %v195
    %v565 = vunpack.c.l.b16 %v196
    %v566 = vunpack.c.h.b16 %v196
    %v567 = vunpack.c.l.b16 %v197
    %v568 = vunpack.c.h.b16 %v197
    %v569 = vunpack.c.l.b16 %v198
    %v570 = vunpack.c.h.b16 %v198
    %v571 = vunpack.c.l.b16 %v199
    %v572 = vunpack.c.h.b16 %v199
    %v573 = vpack.c.b16 %v351, %v349
    %v574 = vpack.c.b16 %v352, %v350
    %v575 = vpack.c.b16 %v355, %v353
    %v576 = vpack.c.b16 %v356, %v354
    %v577 = vpack.c.b16 %v359, %v357
    %v578 = vpack.c.b16 %v360, %v358
    %v579 = vpack.c.b16 %v363, %v361
    %v580 = vpack.c.b16 %v364, %v362
    %v581 = vpack.c.b16 %v367, %v365
    %v582 = vpack.c.b16 %v368, %v366
    %v583 = vpack.c.b16 %v371, %v369
    %v584 = vpack.c.b16 %v372, %v370
    %v585 = vpack.c.b16 %v375, %v373
    %v586 = vpack.c.b16 %v376, %v374
    %v587 = vpack.c.b16 %v379, %v377
    %v588 = vpack.c.b16 %v380, %v378
    %v589 = vpack.c.b16 %v383, %v381
    %v590 = vpack.c.b16 %v384, %v382
    %v591 = vpack.c.b16 %v387, %v385
    %v592 = vpack.c.b16 %v388, %v386
    %v593 = vpack.c.b16 %v391, %v389
    %v594 = vpack.c.b16 %v392, %v390
    %v595 = vpack.c.b16 %v395, %v393
    %v596 = vpack.c.b16 %v396, %v394
    %v597 = vpack.c.b16 %v399, %v397
    %v598 = vpack.c.b16 %v400, %v398
    %v599 = vpack.c.b16 %v403, %v401
    %v600 = vpack.c.b16 %v404, %v402
    %v601 = vpack.c.b16 %v407, %v405
    %v602 = vpack.c.b16 %v408, %v406
    %v603 = vpack.c.b16 %v411, %v409
    %v604 = vpack.c.b16 %v412, %v410
    %v605 = vpack.c.b16 %v415, %v413
    %v606 = vpack.c.b16 %v416, %v414
    %v607 = vpack.c.b16 %v419, %v417
    %v608 = vpack.c.b16 %v420, %v418
    %v609 = vpack.c.b16 %v423, %v421
    %v610 = vpack.c.b16 %v424, %v422
    %v611 = vpack.c.b16 %v427, %v425
    %v612 = vpack.c.b16 %v428, %v426
    %v613 = vpack.c.b16 %v431, %v429
    %v614 = vpack.c.b16 %v432, %v430
    %v615 = vpack.c.b16 %v435, %v433
    %v616 = vpack.c.b16 %v436, %v434
    %v617 = vpack.c.b16 %v439, %v437
    %v618 = vpack.c.b16 %v440, %v438
    %v619 = vpack.c.b16 %v443, %v441
    %v620 = vpack.c.b16 %v444, %v442
    %v621 = vpack.c.b16 %v447, %v445
    %v622 = vpack.c.b16 %v448, %v446
    %v623 = vpack.c.b16 %v451, %v449
    %v624 = vpack.c.b16 %v452, %v450
    %v625 = vpack.c.b16 %v455, %v453
    %v626 = vpack.c.b16 %v456, %v454
    %v627 = vpack.c.b16 %v459, %v457
    %v628 = vpack.c.b16 %v460, %v458
    %v629 = vpack.c.b16 %v463, %v461
    %v630 = vpack.c.b16 %v464, %v462
    %v631 = vpack.c.b16 %v467, %v465
    %v632 = vpack.c.b16 %v468, %v466
    %v633 = vpack.c.b16 %v471, %v469
    %v634 = vpack.c.b16 %v472, %v470
    %v635 = vpack.c.b16 %v475, %v473
    %v636 = vpack.c.b16 %v476, %v474
    %v637 = vpack.c.b16 %v479, %v477
    %v638 = vpack.c.b16 %v480, %v478
    %v639 = vpack.c.b16 %v483, %v481
    %v640 = vpack.c.b16 %v484, %v482
    %v641 = vpack.c.b16 %v487, %v485
    %v642 = vpack.c.b16 %v488, %v486
    %v643 = vpack.c.b16 %v491, %v489
    %v644 = vpack.c.b16 %v492, %v490
    %v645 = vpack.c.b16 %v495, %v493
    %v646 = vpack.c.b16 %v496, %v494
    %v647 = vpack.c.b16 %v499, %v497
    %v648 = vpack.c.b16 %v500, %v498
    %v649 = vpack.c.b16 %v503, %v501
    %v650 = vpack.c.b16 %v504, %v502
    %v651 = vpack.c.b16 %v507, %v505
    %v652 = vpack.c.b16 %v508, %v506
    %v653 = vpack.c.b16 %v511, %v509
    %v654 = vpack.c.b16 %v512, %v510
    %v655 = vpack.c.b16 %v515, %v513
    %v656 = vpack.c.b16 %v516, %v514
    %v657 = vpack.c.b16 %v519, %v517
    %v658 = vpack.c.b16 %v520, %v518
    %v659 = vpack.c.b16 %v523, %v521
    %v660 = vpack.c.b16 %v524, %v522
    %v661 = vpack.c.b16 %v527, %v525
    %v662 = vpack.c.b16 %v528, %v526
    %v663 = vpack.c.b16 %v531, %v529
    %v664 = vpack.c.b16 %v532, %v530
    %v665 = vpack.c.b16 %v535, %v533
    %v666 = vpack.c.b16 %v536, %v534
    %v667 = vpack.c.b16 %v539, %v537
    %v668 = vpack.c.b16 %v540, %v538
    %v669 = vpack.c.b16 %v543, %v541
    %v670 = vpack.c.b16 %v544, %v542
    %v671 = vpack.c.b16 %v547, %v545
    %v672 = vpack.c.b16 %v548, %v546
    %v673 = vpack.c.b16 %v551, %v549
    %v674 = vpack.c.b16 %v552, %v550
    %v675 = vpack.c.b16 %v555, %v553
    %v676 = vpack.c.b16 %v556, %v554
    %v677 = vpack.c.b16 %v559, %v557
    %v678 = vpack.c.b16 %v560, %v558
    %v679 = vpack.c.b16 %v563, %v561
    %v680 = vpack.c.b16 %v564, %v562
    %v681 = vpack.c.b16 %v567, %v565
    %v682 = vpack.c.b16 %v568, %v566
    %v683 = vpack.c.b16 %v571, %v569
    %v684 = vpack.c.b16 %v572, %v570
    %797 = vmatprep.subr.bf16.mxu0 %v574
    %798 = vmatpush1.bf16.msra.mxu0 %v573
    %799 = vmatprep.subr.bf16.mxu0 %v576
    %800 = vmatpush1.bf16.msra.mxu0 %v575
    %801 = vmatprep.subr.bf16.mxu0 %v578
    %802 = vmatpush1.bf16.msra.mxu0 %v577
    %803 = vmatprep.subr.bf16.mxu0 %v580
    %804 = vmatpush1.bf16.msra.mxu0 %v579
    %805 = vmatprep.subr.bf16.mxu0 %v582
    %806 = vmatpush1.bf16.msra.mxu0 %v581
    %807 = vmatprep.subr.bf16.mxu0 %v584
    %808 = vmatpush1.bf16.msra.mxu0 %v583
    %809 = vmatprep.subr.bf16.mxu0 %v586
    %810 = vmatpush1.bf16.msra.mxu0 %v585
    %811 = vmatprep.subr.bf16.mxu0 %v588
    %812 = vmatpush1.bf16.msra.mxu0 %v587
    %813 = vmatprep.subr.bf16.mxu0 %v590
    %814 = vmatpush1.bf16.msra.mxu0 %v589
    %815 = vmatprep.subr.bf16.mxu0 %v592
    %816 = vmatpush1.bf16.msra.mxu0 %v591
    %817 = vmatprep.subr.bf16.mxu0 %v594
    %818 = vmatpush1.bf16.msra.mxu0 %v593
    %819 = vmatprep.subr.bf16.mxu0 %v596
    %820 = vmatpush1.bf16.msra.mxu0 %v595
    %821 = vmatprep.subr.bf16.mxu0 %v598
    %822 = vmatpush1.bf16.msra.mxu0 %v597
    %823 = vmatprep.subr.bf16.mxu0 %v600
    %824 = vmatpush1.bf16.msra.mxu0 %v599
    %825 = vmatprep.subr.bf16.mxu0 %v602
    %826 = vmatpush1.bf16.msra.mxu0 %v601
    %827 = vmatprep.subr.bf16.mxu0 %v604
    %828 = vmatpush1.bf16.msra.mxu0 %v603
    %829 = vmatprep.mubr.bf16.mxu0 %v224
    %830 = vmatmul.mubr.bf16.gmra.mrb[0].mxu0 %v223
    %v831 = vpop.f32.mrb[0].mxu0
    %v832 = vadd.f32 %v205, %v831
    %v833 = vpop.f32.mrb[0].mxu0
    %v834 = vadd.f32 %v209, %v833
    %v835 = vpop.f32.mrb[0].mxu0
    %v836 = vpop.f32.mrb[0].mxu0
    %837 = vdwg.mxu0
    %838 = vmatprep.subr.bf16.mxu0 %v606
    %839 = vmatpush1.bf16.msra.mxu0 %v605
    %840 = vmatprep.subr.bf16.mxu0 %v608
    %841 = vmatpush1.bf16.msra.mxu0 %v607
    %842 = vmatprep.subr.bf16.mxu0 %v610
    %843 = vmatpush1.bf16.msra.mxu0 %v609
    %844 = vmatprep.subr.bf16.mxu0 %v612
    %845 = vmatpush1.bf16.msra.mxu0 %v611
    %846 = vmatprep.subr.bf16.mxu0 %v614
    %847 = vmatpush1.bf16.msra.mxu0 %v613
    %848 = vmatprep.subr.bf16.mxu0 %v616
    %849 = vmatpush1.bf16.msra.mxu0 %v615
    %850 = vmatprep.subr.bf16.mxu0 %v618
    %851 = vmatpush1.bf16.msra.mxu0 %v617
    %852 = vmatprep.subr.bf16.mxu0 %v620
    %853 = vmatpush1.bf16.msra.mxu0 %v619
    %854 = vmatprep.subr.bf16.mxu0 %v622
    %855 = vmatpush1.bf16.msra.mxu0 %v621
    %856 = vmatprep.subr.bf16.mxu0 %v624
    %857 = vmatpush1.bf16.msra.mxu0 %v623
    %858 = vmatprep.subr.bf16.mxu0 %v626
    %859 = vmatpush1.bf16.msra.mxu0 %v625
    %860 = vmatprep.subr.bf16.mxu0 %v628
    %861 = vmatpush1.bf16.msra.mxu0 %v627
    %862 = vmatprep.subr.bf16.mxu0 %v630
    %863 = vmatpush1.bf16.msra.mxu0 %v629
    %864 = vmatprep.subr.bf16.mxu0 %v632
    %865 = vmatpush1.bf16.msra.mxu0 %v631
    %866 = vmatprep.subr.bf16.mxu0 %v634
    %867 = vmatpush1.bf16.msra.mxu0 %v633
    %868 = vmatprep.subr.bf16.mxu0 %v636
    %869 = vmatpush1.bf16.msra.mxu0 %v635
    %870 = vmatprep.mubr.bf16.mxu0 %v226
    %871 = vmatmul.mubr.bf16.gmra.mrb[0].mxu0 %v225
    %v872 = vpop.f32.mrb[0].mxu0
    %v873 = vadd.f32 %v832, %v872
    %v874 = vpop.f32.mrb[0].mxu0
    %v875 = vadd.f32 %v834, %v874
    %v876 = vpop.f32.mrb[0].mxu0
    %v877 = vpop.f32.mrb[0].mxu0
    %878 = vdwg.mxu0
    %879 = vmatprep.subr.bf16.mxu0 %v638
    %880 = vmatpush1.bf16.msra.mxu0 %v637
    %881 = vmatprep.subr.bf16.mxu0 %v640
    %882 = vmatpush1.bf16.msra.mxu0 %v639
    %883 = vmatprep.subr.bf16.mxu0 %v642
    %884 = vmatpush1.bf16.msra.mxu0 %v641
    %885 = vmatprep.subr.bf16.mxu0 %v644
    %886 = vmatpush1.bf16.msra.mxu0 %v643
    %887 = vmatprep.subr.bf16.mxu0 %v646
    %888 = vmatpush1.bf16.msra.mxu0 %v645
    %889 = vmatprep.subr.bf16.mxu0 %v648
    %890 = vmatpush1.bf16.msra.mxu0 %v647
    %891 = vmatprep.subr.bf16.mxu0 %v650
    %892 = vmatpush1.bf16.msra.mxu0 %v649
    %893 = vmatprep.subr.bf16.mxu0 %v652
    %894 = vmatpush1.bf16.msra.mxu0 %v651
    %895 = vmatprep.subr.bf16.mxu0 %v654
    %896 = vmatpush1.bf16.msra.mxu0 %v653
    %897 = vmatprep.subr.bf16.mxu0 %v656
    %898 = vmatpush1.bf16.msra.mxu0 %v655
    %899 = vmatprep.subr.bf16.mxu0 %v658
    %900 = vmatpush1.bf16.msra.mxu0 %v657
    %901 = vmatprep.subr.bf16.mxu0 %v660
    %902 = vmatpush1.bf16.msra.mxu0 %v659
    %903 = vmatprep.subr.bf16.mxu0 %v662
    %904 = vmatpush1.bf16.msra.mxu0 %v661
    %905 = vmatprep.subr.bf16.mxu0 %v664
    %906 = vmatpush1.bf16.msra.mxu0 %v663
    %907 = vmatprep.subr.bf16.mxu0 %v666
    %908 = vmatpush1.bf16.msra.mxu0 %v665
    %909 = vmatprep.subr.bf16.mxu0 %v668
    %910 = vmatpush1.bf16.msra.mxu0 %v667
    %911 = vmatprep.mubr.bf16.mxu0 %v228
    %912 = vmatmul.mubr.bf16.gmra.mrb[0].mxu0 %v227
    %v913 = vpop.f32.mrb[0].mxu0
    %v914 = vadd.f32 %v873, %v913
    %v915 = vpop.f32.mrb[0].mxu0
    %v916 = vadd.f32 %v875, %v915
    %v917 = vpop.f32.mrb[0].mxu0
    %v918 = vpop.f32.mrb[0].mxu0
    %919 = vdwg.mxu0
    %920 = vmatprep.subr.bf16.mxu0 %v670
    %921 = vmatpush1.bf16.msra.mxu0 %v669
    %922 = vmatprep.subr.bf16.mxu0 %v672
    %923 = vmatpush1.bf16.msra.mxu0 %v671
    %924 = vmatprep.subr.bf16.mxu0 %v674
    %925 = vmatpush1.bf16.msra.mxu0 %v673
    %926 = vmatprep.subr.bf16.mxu0 %v676
    %927 = vmatpush1.bf16.msra.mxu0 %v675
    %928 = vmatprep.subr.bf16.mxu0 %v678
    %929 = vmatpush1.bf16.msra.mxu0 %v677
    %930 = vmatprep.subr.bf16.mxu0 %v680
    %931 = vmatpush1.bf16.msra.mxu0 %v679
    %932 = vmatprep.subr.bf16.mxu0 %v682
    %933 = vmatpush1.bf16.msra.mxu0 %v681
    %934 = vmatprep.subr.bf16.mxu0 %v684
    %935 = vmatpush1.bf16.msra.mxu0 %v683
    %936 = vmatprep.subr.bf16.mxu0 0
    %937 = vmatpush1.bf16.msra.mxu0 0
    %938 = vmatprep.subr.bf16.mxu0 0
    %939 = vmatpush1.bf16.msra.mxu0 0
    %940 = vmatprep.subr.bf16.mxu0 0
    %941 = vmatpush1.bf16.msra.mxu0 0
    %942 = vmatprep.subr.bf16.mxu0 0
    %943 = vmatpush1.bf16.msra.mxu0 0
    %944 = vmatprep.subr.bf16.mxu0 0
    %945 = vmatpush1.bf16.msra.mxu0 0
    %946 = vmatprep.subr.bf16.mxu0 0
    %947 = vmatpush1.bf16.msra.mxu0 0
    %948 = vmatprep.subr.bf16.mxu0 0
    %949 = vmatpush1.bf16.msra.mxu0 0
    %950 = vmatprep.subr.bf16.mxu0 0
    %951 = vmatpush1.bf16.msra.mxu0 0
    %952 = vmatprep.mubr.bf16.mxu0 0
    %953 = vmatmul.mubr.bf16.gmra.mrb[0].mxu0 %v229
    %v954 = vpop.f32.mrb[0].mxu0
    %v955 = vadd.f32 %v914, %v954
    %v956 = vpop.f32.mrb[0].mxu0
    %v957 = vadd.f32 %v916, %v956
    %v958 = vpop.f32.mrb[0].mxu0
    %v959 = vpop.f32.mrb[0].mxu0
    %960 = vdwg.mxu0
    %v961 = vmax.f32 %v955, 0.0
    %v962 = vmax.f32 %v957, 0.0
    %v963 = vpack.c.bf16 %v961, %v961
    %v964 = vpack.c.bf16 %v962, %v962
    %v965 = vld [vmem:[#allocation8] sm:$0xf]
    %v966 = vld [vmem:[#allocation8 + $0x4] sm:$0xf]
    %v967 = vld [vmem:[#allocation8 + $0x8] sm:$0xf]
    %v968 = vld [vmem:[#allocation8 + $0xc] sm:$0xf]
    %v969 = vld [vmem:[#allocation8 + $0x10] sm:$0xf]
    %v970 = vld [vmem:[#allocation8 + $0x14] sm:$0xf]
    %v971 = vld [vmem:[#allocation8 + $0x18] sm:$0xf]
    %v972 = vld [vmem:[#allocation8 + $0x1c] sm:$0xf]
    %v973 = vld [vmem:[#allocation8 + $0x20] sm:$0xf]
    %v974 = vld [vmem:[#allocation8 + $0x24] sm:$0xf]
    %v975 = vld [vmem:[#allocation8 + $0x28] sm:$0xf]
    %v976 = vld [vmem:[#allocation8 + $0x2c] sm:$0xf]
    %v977 = vld [vmem:[#allocation8 + $0x30] sm:$0xf]
    %v978 = vld [vmem:[#allocation8 + $0x34] sm:$0xf]
    %v979 = vld [vmem:[#allocation8 + $0x38] sm:$0xf]
    %v980 = vld [vmem:[#allocation8 + $0x3c] sm:$0xf]
    %v981 = vld [vmem:[#allocation8 + $0x40] sm:$0xf]
    %v982 = vld [vmem:[#allocation8 + $0x44] sm:$0xf]
    %v983 = vld [vmem:[#allocation8 + $0x48] sm:$0xf]
    %v984 = vld [vmem:[#allocation8 + $0x4c] sm:$0xf]
    %v985 = vld [vmem:[#allocation8 + $0x50] sm:$0xf]
    %v986 = vld [vmem:[#allocation8 + $0x54] sm:$0xf]
    %v987 = vld [vmem:[#allocation8 + $0x58] sm:$0xf]
    %v988 = vld [vmem:[#allocation8 + $0x5c] sm:$0xf]
    %v989 = vld [vmem:[#allocation8 + $0x60] sm:$0xf]
    %v990 = vld [vmem:[#allocation8 + $0x64] sm:$0xf]
    %v991 = vld [vmem:[#allocation8 + $0x68] sm:$0xf]
    %v992 = vld [vmem:[#allocation8 + $0x6c] sm:$0xf]
    %v993 = vld [vmem:[#allocation8 + $0x70] sm:$0xf]
    %v994 = vld [vmem:[#allocation8 + $0x74] sm:$0xf]
    %v995 = vld [vmem:[#allocation8 + $0x78] sm:$0xf]
    %v996 = vld [vmem:[#allocation8 + $0x7c] sm:$0xf]
    %v997 = vld [vmem:[#allocation10] sm:$0x1]
    %v999 = vlaneseq
    %v1000 = vshrl.u32 %v999, 7
    %v1001 = vsub.s32 0, %v1000
    %v1002 = vrot.slane %v997, %v1001
    %v1036 = vunpack.c.l.b16 %v965
    %v1037 = vunpack.c.l.b16 %v966
    %v1038 = vunpack.c.l.b16 %v967
    %v1039 = vunpack.c.l.b16 %v968
    %v1040 = vunpack.c.l.b16 %v969
    %v1041 = vunpack.c.l.b16 %v970
    %v1042 = vunpack.c.l.b16 %v971
    %v1043 = vunpack.c.l.b16 %v972
    %v1044 = vunpack.c.l.b16 %v973
    %v1045 = vunpack.c.l.b16 %v974
    %v1046 = vunpack.c.l.b16 %v975
    %v1047 = vunpack.c.l.b16 %v976
    %v1048 = vunpack.c.l.b16 %v977
    %v1049 = vunpack.c.l.b16 %v978
    %v1050 = vunpack.c.l.b16 %v979
    %v1051 = vunpack.c.l.b16 %v980
    %v1052 = vunpack.c.l.b16 %v981
    %v1053 = vunpack.c.l.b16 %v982
    %v1054 = vunpack.c.l.b16 %v983
    %v1055 = vunpack.c.l.b16 %v984
    %v1056 = vunpack.c.l.b16 %v985
    %v1057 = vunpack.c.l.b16 %v986
    %v1058 = vunpack.c.l.b16 %v987
    %v1059 = vunpack.c.l.b16 %v988
    %v1060 = vunpack.c.l.b16 %v989
    %v1061 = vunpack.c.l.b16 %v990
    %v1062 = vunpack.c.l.b16 %v991
    %v1063 = vunpack.c.l.b16 %v992
    %v1064 = vunpack.c.l.b16 %v993
    %v1065 = vunpack.c.l.b16 %v994
    %v1066 = vunpack.c.l.b16 %v995
    %v1067 = vunpack.c.l.b16 %v996
    %v1068 = vpack.c.b16 %v1037, %v1036
    %v1069 = vpack.c.b16 %v1039, %v1038
    %v1070 = vpack.c.b16 %v1041, %v1040
    %v1071 = vpack.c.b16 %v1043, %v1042
    %v1072 = vpack.c.b16 %v1045, %v1044
    %v1073 = vpack.c.b16 %v1047, %v1046
    %v1074 = vpack.c.b16 %v1049, %v1048
    %v1075 = vpack.c.b16 %v1051, %v1050
    %v1076 = vpack.c.b16 %v1053, %v1052
    %v1077 = vpack.c.b16 %v1055, %v1054
    %v1078 = vpack.c.b16 %v1057, %v1056
    %v1079 = vpack.c.b16 %v1059, %v1058
    %v1080 = vpack.c.b16 %v1061, %v1060
    %v1081 = vpack.c.b16 %v1063, %v1062
    %v1082 = vpack.c.b16 %v1065, %v1064
    %v1083 = vpack.c.b16 %v1067, %v1066
    %1100 = vmatprep.subr.bf16.mxu0 0
    %1101 = vmatpush1.bf16.msra.mxu0 %v1068
    %1102 = vmatprep.subr.bf16.mxu0 0
    %1103 = vmatpush1.bf16.msra.mxu0 %v1069
    %1104 = vmatprep.subr.bf16.mxu0 0
    %1105 = vmatpush1.bf16.msra.mxu0 %v1070
    %1106 = vmatprep.subr.bf16.mxu0 0
    %1107 = vmatpush1.bf16.msra.mxu0 %v1071
    %1108 = vmatprep.subr.bf16.mxu0 0
    %1109 = vmatpush1.bf16.msra.mxu0 %v1072
    %1110 = vmatprep.subr.bf16.mxu0 0
    %1111 = vmatpush1.bf16.msra.mxu0 %v1073
    %1112 = vmatprep.subr.bf16.mxu0 0
    %1113 = vmatpush1.bf16.msra.mxu0 %v1074
    %1114 = vmatprep.subr.bf16.mxu0 0
    %1115 = vmatpush1.bf16.msra.mxu0 %v1075
    %1116 = vmatprep.subr.bf16.mxu0 0
    %1117 = vmatpush1.bf16.msra.mxu0 %v1076
    %1118 = vmatprep.subr.bf16.mxu0 0
    %1119 = vmatpush1.bf16.msra.mxu0 %v1077
    %1120 = vmatprep.subr.bf16.mxu0 0
    %1121 = vmatpush1.bf16.msra.mxu0 %v1078
    %1122 = vmatprep.subr.bf16.mxu0 0
    %1123 = vmatpush1.bf16.msra.mxu0 %v1079
    %1124 = vmatprep.subr.bf16.mxu0 0
    %1125 = vmatpush1.bf16.msra.mxu0 %v1080
    %1126 = vmatprep.subr.bf16.mxu0 0
    %1127 = vmatpush1.bf16.msra.mxu0 %v1081
    %1128 = vmatprep.subr.bf16.mxu0 0
    %1129 = vmatpush1.bf16.msra.mxu0 %v1082
    %1130 = vmatprep.subr.bf16.mxu0 0
    %1131 = vmatpush1.bf16.msra.mxu0 %v1083
    %1132 = vmatprep.mubr.bf16.mxu0 %v964
    %1133 = vmatmul.mubr.bf16.gmra.mrb[0].mxu0 %v963
    %v1134 = vpop.f32.mrb[0].mxu0
    %v1135 = vadd.f32 %v1002, %v1134
    %v1136 = vpop.f32.mrb[0].mxu0
    %v1137 = vpop.f32.mrb[0].mxu0
    %v1138 = vpop.f32.mrb[0].mxu0
    %1139 = vdwg.mxu0
    %1140 = vst [vmem:[#allocation11] sm:$0xff] %v1135
    // Predicated region
    $region42: #{tpu_custom_call.1} parent=1 // pred_check
      _
    $region43: #{tpu_custom_call.1} parent=1 // pred_check_branch
      %1142 = sbr.rel (0) target = $region45
    $region44: #{tpu_custom_call.1} parent=1 // pred_region
      %s1144 = ssub.s32 128, 128
      %1145 = vsyncadd [#allocation4], %s1144
      %s1147 = sshll.u32 [#allocation11], 4
      %s1148 = int_to_ptr.vmem [resolvable:$true] %s1147
      %1150 = dma.vmem_to_hbm [thread:$0]  %s1148, 128, %s5, [#allocation4]
    $region45: #{tpu_custom_call.1} parent=1 // pred_fallthru
      _
    // Predicated region
    $region46: #{tpu_custom_call.1} parent=1 // pred_check
      _
    $region47: #{tpu_custom_call.1} parent=1 // pred_check_branch
      %1152 = sbr.rel (0) target = $region49
    $region48: #{tpu_custom_call.1} parent=1 // pred_region
      %1153 = dma.done [#allocation4], 128
    $region49: #{tpu_custom_call.1} parent=1 // pred_fallthru
      _
    %1154 = vsyncpa [#allocation3], 1
    %1155 = vsyncpa [#allocation6], 1
    %1156 = vsyncpa [#allocation9], 1
    %1157 = vsyncpa [#allocation4], 1

</llo_original>
